<compile_context>
chip_gen: v7x
topology: tpu7x:2x2x1
jax: 0.10.0
libtpu: 0.0.40
codegen_flags: <defaults>
</compile_context>

<pallas_src>
import math

import jax
import jax.numpy as jnp
from jax.experimental import pallas as pl
from jax.experimental.pallas import tpu as pltpu


def _round_up(x, m):
    return ((x + m - 1) // m) * m


def _wave_pe_kernel(pos_ref, const_ref, out_ref):
    # pos_ref:   (TILE_N, 1)   raw positions
    # const_ref: (2, TILE_D)   row 0: div_term repeated per lane pair
    #                          row 1: phase [0, pi/2, 0, pi/2, ...] -> odd lanes = cos
    # out_ref:   (TILE_N, TILE_D)
    p = (pos_ref[...] - 400.0) / 10.0        # (TILE_N, 1), same rounding order as reference
    div = const_ref[0:1, :]                  # (1, TILE_D)
    phase = const_ref[1:2, :]                # (1, TILE_D)
    # cos(x) = sin(x + pi/2): one EUP transcendental per element.
    # (f32-accurate for the intended position range; |x| here is O(10).)
    out_ref[...] = jnp.sin(p * div + phase)  # (TILE_N, TILE_D)


def wave_positional_encoding(pos, d_model, max_len=500, tile_n=None):
    """pos: (N,) positions. Returns (N, d_model) float32 wave positional encoding."""
    del max_len  # unused in the forward pass (matches the PyTorch module)
    assert d_model % 2 == 0, "d_model must be even (same assumption as PyTorch module)"
    n = pos.shape[0]

    # --- D tiling ---------------------------------------------------------
    # Lane-dense 512-lane tiles when d_model is a large multiple of 128;
    # otherwise a single exact full-D block (no lane pad, no write amplification,
    # only the final sub-128 lane group of each row uses a masked store).
    if d_model % 128 == 0 and d_model > 512:
        tile_d = 512
    else:
        tile_d = d_model
    grid_d = pl.cdiv(d_model, tile_d)

    # --- N tiling ---------------------------------------------------------
    # Per pipeline buffer we hold the (tile_n, tile_d) f32 output tile plus the
    # pos block, which lives in VMEM lane-padded to (tile_n, 128). Budget each
    # buffer at ~4 MiB (~8 MiB double-buffered) -> safe under v5e's 16 MiB
    # default scoped VMEM and leaves headroom on v7x's 64 MiB physical VMEM.
    bytes_per_row = 4 * tile_d + 4 * 128
    budget_rows = max(8, (((4 * 1024 * 1024) // bytes_per_row) // 8) * 8)
    tile_n = 1024 if tile_n is None else max(8, (tile_n // 8) * 8)
    tile_n = min(tile_n, budget_rows)
    if n > 8:
        # Guarantee >= 2 row steps so both v7x TensorCores (and the output
        # double-buffer) get work.
        tile_n = min(tile_n, _round_up(pl.cdiv(n, 2), 8))
    tile_n = min(tile_n, _round_up(n, 8))
    grid_n = pl.cdiv(n, tile_n)

    # --- constants (built once in the wrapper, resident across grid steps) ---
    div_term = jnp.exp(
        jnp.arange(0, d_model, 2, dtype=jnp.float32) * (-(math.log(100.0) / d_model))
    )
    consts = jnp.stack(
        [
            jnp.repeat(div_term, 2),  # lanes 2k and 2k+1 share one frequency
            jnp.tile(jnp.array([0.0, math.pi / 2.0], jnp.float32), d_model // 2),
        ],
        axis=0,
    )  # (2, d_model)

    pos_col = pos.astype(jnp.float32).reshape(n, 1)

    return pl.pallas_call(
        _wave_pe_kernel,
        out_shape=jax.ShapeDtypeStruct((n, d_model), jnp.float32),
        grid_spec=pltpu.PrefetchScalarGridSpec(
            num_scalar_prefetch=0,
            grid=(grid_n, grid_d),
            in_specs=[
                pl.BlockSpec((tile_n, 1), lambda i, j: (i, 0)),
                pl.BlockSpec((2, tile_d), lambda i, j: (0, j)),  # resident constants
            ],
            out_specs=pl.BlockSpec((tile_n, tile_d), lambda i, j: (i, j)),
        ),
        compiler_params=pltpu.CompilerParams(
            dimension_semantics=("parallel", "parallel"),
        ),
        cost_estimate=pl.CostEstimate(
            flops=2 * n * d_model,
            transcendentals=n * d_model,
            bytes_accessed=4 * n * d_model + 4 * n + 8 * d_model,
        ),
    )(pos_col, consts)


def _reference(pos, d_model):
    # Pure-JAX reference mirroring the PyTorch forward exactly.
    div_term = jnp.exp(
        jnp.arange(0, d_model, 2, dtype=jnp.float32) * (-(math.log(100.0) / d_model))
    )
    p = ((pos.astype(jnp.float32) - 400.0) / 10.0)[:, None]  # (N, 1)
    pe = jnp.zeros((pos.shape[0], d_model), jnp.float32)
    pe = pe.at[:, 0::2].set(jnp.sin(div_term * p))
    pe = pe.at[:, 1::2].set(jnp.cos(div_term * p))
    return pe


if __name__ == "__main__":
    key = jax.random.PRNGKey(0)
    k_a, k_b, k_c = jax.random.split(key, 3)

    # Config A: small d_model (32) -> exact-D block, no lane pad, no slice pass.
    n_a, d_a = 8, 32
    pos_a = jax.random.uniform(k_a, (n_a,), jnp.float32, minval=350.0, maxval=750.0)
    pe_a = jax.block_until_ready(wave_positional_encoding(pos_a, d_a))
    ref_a = _reference(pos_a, d_a)
    assert pe_a.shape == (n_a, d_a) and pe_a.dtype == jnp.float32
    assert jnp.allclose(pe_a, ref_a, atol=5e-5, rtol=1e-5)

    # Config B: multi-tile grid with ragged N (masked last row block, no N pad).
    n_b, d_b = 300, 256
    pos_b = jax.random.uniform(k_b, (n_b,), jnp.float32, minval=350.0, maxval=750.0)
    pe_b = jax.block_until_ready(wave_positional_encoding(pos_b, d_b, tile_n=128))
    ref_b = _reference(pos_b, d_b)
    assert pe_b.shape == (n_b, d_b) and pe_b.dtype == jnp.float32
    assert jnp.allclose(pe_b, ref_b, atol=5e-5, rtol=1e-5)

    # Config C: d_model not a multiple of 128 and ragged N -> masked tail lanes/rows.
    n_c, d_c = 37, 200
    pos_c = jax.random.uniform(k_c, (n_c,), jnp.float32, minval=350.0, maxval=750.0)
    pe_c = jax.block_until_ready(wave_positional_encoding(pos_c, d_c))
    ref_c = _reference(pos_c, d_c)
    assert pe_c.shape == (n_c, d_c) and pe_c.dtype == jnp.float32
    assert jnp.allclose(pe_c, ref_c, atol=5e-5, rtol=1e-5)

    print("KERNEL_OK")
</pallas_src>

<mosaic_0001>
module attributes {stable_mosaic.version = 11 : i64} {
  func.func @_wave_pe_kernel(%arg0: i32, %arg1: i32, %arg2: memref<8x1xf32, #tpu.memory_space<vmem>>, %arg3: memref<2x32xf32, #tpu.memory_space<vmem>>, %arg4: memref<8x32xf32, #tpu.memory_space<vmem>>) attributes {dimension_semantics = [#tpu.dimension_semantics<parallel>, #tpu.dimension_semantics<parallel>], iteration_bounds = array<i64: 1, 1>, scalar_prefetch = 0 : i64, scratch_operands = 0 : i64, tpu.core_type = #tpu.core_type<tc>, window_params = [{transform_indices = @transform_0, window_bounds = array<i64: 8, 1>}, {transform_indices = @transform_1, window_bounds = array<i64: 2, 32>}, {transform_indices = @transform_2, window_bounds = array<i64: 8, 32>}]} {
    %c0 = arith.constant 0 : index
    %c0_0 = arith.constant 0 : index
    %0 = vector.load %arg2[%c0, %c0_0] : memref<8x1xf32, #tpu.memory_space<vmem>>, vector<8x1xf32>
    %cst = arith.constant 4.000000e+02 : f32
    %1 = vector.broadcast %cst : f32 to vector<8x1xf32>
    %2 = arith.subf %0, %1 : vector<8x1xf32>
    %cst_1 = arith.constant 1.000000e+01 : f32
    %3 = vector.broadcast %cst_1 : f32 to vector<8x1xf32>
    %4 = arith.divf %2, %3 : vector<8x1xf32>
    %c0_2 = arith.constant 0 : index
    %c0_3 = arith.constant 0 : index
    %5 = vector.load %arg3[%c0_2, %c0_3] : memref<2x32xf32, #tpu.memory_space<vmem>>, vector<1x32xf32>
    %c1 = arith.constant 1 : index
    %c0_4 = arith.constant 0 : index
    %6 = vector.load %arg3[%c1, %c0_4] : memref<2x32xf32, #tpu.memory_space<vmem>>, vector<1x32xf32>
    %7 = vector.broadcast %4 : vector<8x1xf32> to vector<8x32xf32>
    %8 = vector.broadcast %5 : vector<1x32xf32> to vector<8x32xf32>
    %9 = arith.mulf %7, %8 : vector<8x32xf32>
    %10 = vector.broadcast %6 : vector<1x32xf32> to vector<8x32xf32>
    %11 = arith.addf %9, %10 : vector<8x32xf32>
    %12 = math.sin %11 : vector<8x32xf32>
    %c0_5 = arith.constant 0 : index
    %c0_6 = arith.constant 0 : index
    %13 = vector.load %arg4[%c0_5, %c0_6] : memref<8x32xf32, #tpu.memory_space<vmem>>, vector<8x32xf32>
    tpu.vector_store %arg4[%c0_5, %c0_6], %12 {strides = array<i32>} : memref<8x32xf32, #tpu.memory_space<vmem>>, vector<8x32xf32>,
    return
  }
  func.func @transform_0(%arg0: i32, %arg1: i32) -> (i32, i32) {
    %c0_i32 = arith.constant 0 : i32
    %c0_i32_0 = arith.constant 0 : i32
    return %arg0, %c0_i32 : i32, i32
  }
  func.func @transform_1(%arg0: i32, %arg1: i32) -> (i32, i32) {
    %c0_i32 = arith.constant 0 : i32
    %c0_i32_0 = arith.constant 0 : i32
    return %c0_i32, %arg1 : i32, i32
  }
  func.func @transform_2(%arg0: i32, %arg1: i32) -> (i32, i32) {
    %c0_i32 = arith.constant 0 : i32
    return %arg0, %arg1 : i32, i32
  }
}

</mosaic_0001>

<llo_original>
// kernel: tpu_custom_call.1
$region0: #{tpu_custom_call.1}
  #allocation0 [shape = 'u32[]', space=smem, size = 0x4, offset = 0x4, fixed_abs, tag = 'smem constant byte address 0x4 - core index']
  #allocation1 [shape = 'u32[144,128]{1,0:T(1,128)}', space=vmem, size = 0x12000, scoped, tag = 'internal scratch']
  %s0 = inlined_call_operand.vmem [shape: f32[8,1], index: 0, kind: input, shape index: {}]
  %s1 = inlined_call_operand.vmem [shape: f32[2,32], index: 1, kind: input, shape index: {}]
  %s2 = inlined_call_operand.hbm [shape: f32[8,32], index: 2, kind: output, shape index: {}]
  %s3 = sld [smem:[#allocation0]]
  $region18: #{tpu_custom_call.1} parent=0
    _
  %s5 = ssub.s32 1, %s3
  %s6 = scalar_select 0, %s5, %s3
  $region1: #{tpu_custom_call.1} parent=0
    #allocation2 [shape = 'u8[4096]{0}', space=vmem, size = 0x1000, scoped, tag = 'output window, operand 0, single buffered']
    #allocation3 [shape = 's32[1]{0}', space=sflag, size = 0x4, scoped, tag = 'scoped memory for tpu_custom_call.1']
    %7 = vsyncpa [#allocation3], 0
    // Predicated region
    $region2: #{tpu_custom_call.1} parent=1 // pred_check
      _
    $region3: #{tpu_custom_call.1} parent=1 // pred_check_branch
      %9 = sbr.rel (0) target = $region5
    $region4: #{tpu_custom_call.1} parent=1 // pred_region
      _
    $region5: #{tpu_custom_call.1} parent=1 // pred_fallthru
      _
    // Predicated region
    $region6: #{tpu_custom_call.1} parent=1 // pred_check
      _
    $region7: #{tpu_custom_call.1} parent=1 // pred_check_branch
      %11 = sbr.rel (0) target = $region9
    $region8: #{tpu_custom_call.1} parent=1 // pred_region
      _
    $region9: #{tpu_custom_call.1} parent=1 // pred_fallthru
      _
    %v12 = vld [vmem:[%s0] sm:$0xff]
    %v13 = vsub.f32 %v12, 400.0
    %v14 = vrcp.pop 10.0
    %v15 = vmul.f32 %v13, %v14
    %v16 = vld [vmem:[%s1] sm:$0x1]
    %v17 = vld [vmem:[%s1 + $0x1] sm:$0x1]
    %19 = vset.pattern.permute.xlu0 0
    %20 = vperm.xlu0 %19, %v15
    %v21 = vpop.permute.xlu0 %20
    %v23 = vlaneseq
    %v24 = vshrl.u32 %v23, 7
    %v25 = vsub.s32 0, %v24
    %v26 = vrot.slane %v16, %v25
    %v27 = vmul.f32 %v21, %v26
    %v28 = vlaneseq
    %v29 = vshrl.u32 %v28, 7
    %v30 = vsub.s32 0, %v29
    %v31 = vrot.slane %v17, %v30
    %v32 = vadd.f32 %v27, %v31
    %v33 = vand.u32 2147483647, %v32
    %vm34 = vcmp.le.f32.partialorder %v33, 0.7853982
    %vm35 = vcmp.lt.s32.totalorder %v32, 0
    %v36 = vand.u32 %v32, 2139095040
    %v37 = vshrl.u32 %v36, 23
    %v38 = vsub.s32 %v37, 127
    %v39 = vand.u32 2147483647, %v32
    %v40 = vand.u32 %v39, 8388607
    %v41 = vor.u32 %v40, 8388608
    %v42 = vsub.s32 0, %v41
    %v43 = vadd.s32 %v38, 1
    %vm44 = vcmp.gt.s32.totalorder %v43, 0
    %v45 = vsel %vm44, %v43, 0
    %v46 = vshrl.u32 %v45, 5
    %v47 = vand.u32 %v45, 31
    %v48 = vsub.s32 32, %v47
    %v49 = vshrl.u32 683565275, %v48
    %v50 = vshll.u32 683565275, %v47
    %v51 = vshrl.u32 2475754826, %v48
    %v52 = vor.u32 %v50, %v51
    %v53 = vshll.u32 2475754826, %v47
    %v54 = vshrl.u32 2131351028, %v48
    %v55 = vor.u32 %v53, %v54
    %v56 = vshll.u32 2131351028, %v47
    %v57 = vshrl.u32 2102212464, %v48
    %v58 = vor.u32 %v56, %v57
    %v59 = vshll.u32 2102212464, %v47
    %v60 = vshrl.u32 920167782, %v48
    %v61 = vor.u32 %v59, %v60
    %v62 = vshll.u32 920167782, %v47
    %v63 = vshrl.u32 1326507024, %v48
    %v64 = vor.u32 %v62, %v63
    %vm65 = vcmp.lt.s32.totalorder %v46, 1
    %vm66 = vcmp.lt.s32.totalorder %v46, 2
    %vm67 = vcmp.lt.s32.totalorder %v46, 3
    %vm68 = vcmp.lt.s32.totalorder %v46, 4
    %v69 = vsel %vm65, %v49, %v52
    %v70 = vsel %vm68, %v58, 2102212464
    %v71 = vsel %vm67, %v55, %v70
    %v72 = vsel %vm66, %v69, %v71
    %v73 = vsel %vm65, %v52, %v55
    %v74 = vsel %vm68, %v61, 920167782
    %v75 = vsel %vm67, %v58, %v74
    %v76 = vsel %vm66, %v73, %v75
    %v77 = vsel %vm65, %v55, %v58
    %v78 = vsel %vm68, %v64, 1326507024
    %v79 = vsel %vm67, %v61, %v78
    %v80 = vsel %vm66, %v77, %v79
    %v81 = vshll.u32 %v41, 8
    %v82 = vmul.u32.u64.compose %v81, %v80
    %v83 = vextract.low.u32 %v82
    %v84 = vextract.high.u32 %v82
    %v85 = vmul.u32.u64.compose %v81, %v76
    %v86 = vextract.low.u32 %v85
    %v87 = vextract.high.u32 %v85
    %v88 = vmul.u32 %v81, %v72
    %v89 = vadd.s32 %v84, %v86
    %vm90 = vc.u32 %v84, %v86
    %v91 = vadd.s32 %v87, 1
    %v92 = vsel %vm90, %v91, %v87
    %v93 = vadd.s32 %v88, %v92
    %v94 = vadd.s32 %v93, 536870912
    %v95 = vshrl.u32 %v94, 30
    %v96 = vshll.u32 %v95, 30
    %v97 = vsub.s32 %v93, %v96
    %vm98 = vcmp.lt.s32.totalorder %v97, 0
    %v99 = vsub.s32 0, %v97
    %v100 = vsel %vm98, %v99, %v97
    %v101 = vclz %v100
    %v102 = vsub.s32 %v101, 2
    %vm103 = vcmp.gt.s32.totalorder 0, %v102
    %v104 = vsel %vm103, 0, %v102
    %v105 = vsub.s32 32, %v104
    %v106 = vshll.u32 %v97, %v104
    %v107 = vshrl.u32 %v89, %v105
    %v108 = vor.u32 %v106, %v107
    %v109 = vsub.s32 4294967266, %v104
    %v110 = vadd.s32 %v109, 127
    %v111 = vshll.u32 %v110, 23
    %v112 = vor.u32 4788187, %v111
    %v113 = vand.u32 2147483647, %v112
    %v115 = vcvt.s32.f32 %v108
    %v116 = vmul.f32 %v115, %v113
    %v117 = vxor.u32 %v116, 2147483648
    %v118 = vsel %vm35, %v117, %v116
    %v119 = vsub.s32 4, %v95
    %v120 = vsel %vm35, %v119, %v95
    %v121 = vsel %vm34, %v32, %v118
    %v122 = vsel %vm34, 0, %v120
    %v123 = vcosq.f32.pop %v121
    %v124 = vsinq.f32.pop %v121
    %vm125 = vweird.f32 %v32
    %v126 = vadd.s32 %v122, 3
    %v127 = vand.u32 %v126, 3
    %vm128 = vcmp.lt.s32.totalorder %v127, 2
    %vm129 = vcmp.eq.s32.totalorder %v127, 0
    %v130 = vxor.u32 %v124, 2147483648
    %v131 = vsel %vm129, %v123, %v130
    %vm132 = vcmp.eq.s32.totalorder %v127, 2
    %v133 = vxor.u32 %v123, 2147483648
    %v134 = vsel %vm132, %v133, %v124
    %v135 = vsel %vm128, %v131, %v134
    %v136 = vsel %vm125, nan, %v135
    %vm137 = vcmask 261120
    %138 = vst.msk [vmem:[#allocation2] sm:$0xff] %vm137, %v136
    // Predicated region
    $region10: #{tpu_custom_call.1} parent=1 // pred_check
      _
    $region11: #{tpu_custom_call.1} parent=1 // pred_check_branch
      %140 = sbr.rel (0) target = $region13
    $region12: #{tpu_custom_call.1} parent=1 // pred_region
      %s142 = ssub.s32 128, 128
      %143 = vsyncadd [#allocation3], %s142
      %s145 = sshll.u32 [#allocation2], 4
      %s146 = int_to_ptr.vmem [resolvable:$true] %s145
      %148 = dma.vmem_to_hbm [thread:$0]  %s146, 128, %s2, [#allocation3]
    $region13: #{tpu_custom_call.1} parent=1 // pred_fallthru
      _
    // Predicated region
    $region14: #{tpu_custom_call.1} parent=1 // pred_check
      _
    $region15: #{tpu_custom_call.1} parent=1 // pred_check_branch
      %150 = sbr.rel (0) target = $region17
    $region16: #{tpu_custom_call.1} parent=1 // pred_region
      %151 = dma.done [#allocation3], 128
    $region17: #{tpu_custom_call.1} parent=1 // pred_fallthru
      _
    %152 = vsyncpa [#allocation3], 1

</llo_original>
